<compile_context>
chip_gen: v5e
topology: v5e:2x2
jax: 0.10.0
libtpu: 0.0.40
codegen_flags: <defaults>
</compile_context>

<pallas_src>
import functools

import jax
import jax.numpy as jnp
from jax.experimental import pallas as pl
from jax.experimental.pallas import tpu as pltpu

_VMEM_LIMIT = 40 << 20  # scoped-VMEM budget for every pallas_call


# ---------------------------------------------------------------------------
# Fused single-pass kernel (whole x resident in VMEM).
# ---------------------------------------------------------------------------
def _fused_kernel(x_ref, wt_ref, b_ref, o_ref, *, inv_t):
    xb = x_ref[...]                                            # (B, C, T)
    mean = jnp.sum(xb.astype(jnp.float32), axis=-1) * inv_t    # (B, C) f32
    y = jax.lax.dot_general(mean, wt_ref[...],
                            dimension_numbers=(((1,), (0,)), ((), ())),
                            preferred_element_type=jnp.float32)
    y = y + b_ref[...]                                         # (B, C) + (1, C)
    s = 1.0 / (1.0 + jnp.exp(-y))                              # sigmoid, f32
    s = s.astype(xb.dtype)[:, :, None]                         # (B, C, 1)
    o_ref[...] = (s + s * xb).astype(o_ref.dtype)


# ---------------------------------------------------------------------------
# Stage 1: pooled sums (lane-partial accumulation, pure VPU in the hot loop).
# ---------------------------------------------------------------------------
def _accum_chunks(x_ref, acc_ref, *, tt, rows, masked, base, t_total):
    """Add all 128-lane chunks of the current (rows, tt) tile into acc_ref."""
    n_full = tt // 128
    rem = tt % 128
    if masked:
        iota = jax.lax.broadcasted_iota(jnp.int32, (rows, 128), 1)
    for k in range(n_full):
        lo = k * 128
        chunk = x_ref[:, lo:lo + 128].astype(jnp.float32)
        if masked:
            chunk = jnp.where(base + lo + iota < t_total, chunk, 0.0)
        acc_ref[...] += chunk
    if rem:  # only possible when the tile is the whole (non-128-multiple) T
        lo = n_full * 128
        chunk = x_ref[:, lo:lo + rem].astype(jnp.float32)
        if masked:
            iota_r = jax.lax.broadcasted_iota(jnp.int32, (rows, rem), 1)
            chunk = jnp.where(base + lo + iota_r < t_total, chunk, 0.0)
        acc_ref[:, :rem] += chunk


def _pool_kernel(x_ref, acc_ref, *, tt, t_total, rows):
    p = pl.program_id(0)            # split index ("parallel": maps to a core)
    t = pl.program_id(1)            # tile index within the split ("arbitrary")
    ntc = pl.num_programs(1)
    g = p * ntc + t                 # logical T-tile index

    @pl.when(t == 0)
    def _():
        acc_ref[...] = jnp.zeros_like(acc_ref)

    full = (g + 1) * tt <= t_total  # tile entirely inside [0, T)

    @pl.when(full)
    def _():
        _accum_chunks(x_ref, acc_ref, tt=tt, rows=rows,
                      masked=False, base=0, t_total=t_total)

    @pl.when(jnp.logical_not(full))
    def _():
        _accum_chunks(x_ref, acc_ref, tt=tt, rows=rows,
                      masked=True, base=g * tt, t_total=t_total)


# ---------------------------------------------------------------------------
# Stage 2: gate  out = s + s * x  (one mul + one add per element).
# ---------------------------------------------------------------------------
def _gate_kernel(s_ref, x_ref, o_ref, *, n_chunks, rem):
    s = s_ref[...]                                             # (R, 128), x.dtype
    for k in range(n_chunks):
        lo = k * 128
        xk = x_ref[:, lo:lo + 128]
        o_ref[:, lo:lo + 128] = s + s * xk
    if rem:
        lo = n_chunks * 128
        sr = s[:, :rem]
        o_ref[:, lo:lo + rem] = sr + sr * x_ref[:, lo:lo + rem]


# ---------------------------------------------------------------------------
# Wrapper.
# ---------------------------------------------------------------------------
def _pick_tt(T, row_bytes, target_bytes):
    """Largest 128-multiple tile width within the byte budget (>=128)."""
    cols = (target_bytes // max(row_bytes, 1)) // 128 * 128
    tt = max(128, cols)
    if tt >= T:
        return T, 1                 # single full-dim tile (legal for any T)
    return tt, pl.cdiv(T, tt)


def fms(x, w, b, *, target_block_bytes=8 << 20, fused_threshold_bytes=12 << 20):
    """x: (B, C, T); w: (C, C) PyTorch Linear weight W[out, in]; b: (C,)."""
    B, C, T = x.shape
    R = B * C
    itemsize = jnp.dtype(x.dtype).itemsize
    x_bytes = R * T * itemsize

    w_f32 = w.astype(jnp.float32)
    b_f32 = b.astype(jnp.float32)

    # ---------------- fused single-pass path (x resident in VMEM) ----------
    if x_bytes <= fused_threshold_bytes:
        wt = w_f32.T                                  # so mean @ wt == mean @ W.T
        b2 = b_f32.reshape(1, C)
        return pl.pallas_call(
            functools.partial(_fused_kernel, inv_t=1.0 / T),
            out_shape=jax.ShapeDtypeStruct((B, C, T), x.dtype),
            compiler_params=pltpu.CompilerParams(vmem_limit_bytes=_VMEM_LIMIT),
        )(x, wt, b2)

    # ---------------- tiled two-pass path -----------------------------------
    x2 = x.reshape(R, T)                              # fold B into sublane rows
    tt, n_t = _pick_tt(T, R * itemsize, target_block_bytes)
    n_split = 2 if n_t >= 2 else 1                    # 2-way split -> both TCs on v7x
    ntc = pl.cdiv(n_t, n_split)

    # Stage 1: lane-partial sums, resident (R, 128) accumulator per split.
    partials = pl.pallas_call(
        functools.partial(_pool_kernel, tt=tt, t_total=T, rows=R),
        out_shape=jax.ShapeDtypeStruct((R, 128 * n_split), jnp.float32),
        grid=(n_split, ntc),
        in_specs=[
            # Clamp the logical tile index; over-hanging steps are fully masked.
            pl.BlockSpec((R, tt),
                         lambda p, t: (0, jnp.minimum(p * ntc + t, n_t - 1))),
        ],
        out_specs=pl.BlockSpec((R, 128), lambda p, t: (0, p)),
        compiler_params=pltpu.CompilerParams(
            dimension_semantics=("parallel", "arbitrary"),
            vmem_limit_bytes=_VMEM_LIMIT),
    )(x2)

    # Tiny finishing ops in XLA: lane reduce, mean, Linear, sigmoid, cast.
    sums = jnp.sum(partials, axis=-1)                 # (R,) total per-row sums
    mean = (sums * (1.0 / T)).reshape(B, C)
    s = jax.nn.sigmoid(mean @ w_f32.T + b_f32)        # (B, C) f32
    s_b = jnp.broadcast_to(s.reshape(R, 1).astype(x.dtype), (R, 128))

    # Stage 2: streaming gate, lane-dense tiles, resident pre-broadcast gate.
    # TODO(synk): sweep pipeline_mode=pl.Buffered(3) on x/out specs for v7x if
    # a trace shows exposed DMA at step boundaries.
    out2 = pl.pallas_call(
        functools.partial(_gate_kernel, n_chunks=tt // 128, rem=tt % 128),
        out_shape=jax.ShapeDtypeStruct((R, T), x.dtype),
        grid=(n_t,),
        in_specs=[
            pl.BlockSpec((R, 128), lambda t: (0, 0)),   # gate, resident, tiny
            pl.BlockSpec((R, tt), lambda t: (0, t)),    # x T-tile
        ],
        out_specs=pl.BlockSpec((R, tt), lambda t: (0, t)),
        compiler_params=pltpu.CompilerParams(
            dimension_semantics=("parallel",),
            vmem_limit_bytes=_VMEM_LIMIT),
    )(s_b, x2)
    return out2.reshape(B, C, T)


def fms_reference(x, w, b):
    mean = jnp.mean(x.astype(jnp.float32), axis=-1)                 # (B, C)
    s = jax.nn.sigmoid(mean @ w.astype(jnp.float32).T
                       + b.astype(jnp.float32))                     # (B, C)
    s = s[:, :, None]                                               # (B, C, 1)
    return (s + s * x.astype(jnp.float32)).astype(x.dtype)


if __name__ == "__main__":
    key = jax.random.PRNGKey(0)
    kx, kw, kb, kx2 = jax.random.split(key, 4)

    # Case 1: fused single-pass path (whole x resident in VMEM).
    B, C, T = 2, 16, 256
    x = jax.random.normal(kx, (B, C, T), dtype=jnp.float32)
    bound = 1.0 / (C ** 0.5)
    w = jax.random.uniform(kw, (C, C), minval=-bound, maxval=bound,
                           dtype=jnp.float32)
    b = jax.random.uniform(kb, (C,), minval=-bound, maxval=bound,
                           dtype=jnp.float32)
    ref = fms_reference(x, w, b)
    out = jax.block_until_ready(fms(x, w, b))
    assert out.shape == (B, C, T)
    assert jnp.allclose(out, ref, atol=1e-5, rtol=1e-5), "mismatch (fused)"

    # Case 2: force the tiled two-pass path (2 T-tiles, 2-way split pooling).
    out2 = jax.block_until_ready(
        fms(x, w, b, target_block_bytes=1, fused_threshold_bytes=0))
    assert jnp.allclose(out2, ref, atol=1e-5, rtol=1e-5), "mismatch (tiled)"

    # Case 3: ragged T (not a 128-multiple), odd C, odd tile count
    # (exercises lane masking + clamped over-hanging grid step).
    B3, C3, T3 = 2, 20, 300
    x3 = jax.random.normal(kx2, (B3, C3, T3), dtype=jnp.float32)
    bound3 = 1.0 / (C3 ** 0.5)
    w3 = jax.random.uniform(kw, (C3, C3), minval=-bound3, maxval=bound3,
                            dtype=jnp.float32)
    b3 = jax.random.uniform(kb, (C3,), minval=-bound3, maxval=bound3,
                            dtype=jnp.float32)
    ref3 = fms_reference(x3, w3, b3)
    out3 = jax.block_until_ready(
        fms(x3, w3, b3, target_block_bytes=1, fused_threshold_bytes=0))
    assert jnp.allclose(out3, ref3, atol=1e-5, rtol=1e-5), "mismatch (ragged)"

    # Case 4: tiled path with a single full-T (non-128-multiple) tile
    # (exercises the in-tile remainder chunk).
    B4, C4, T4 = 2, 16, 200
    x4 = jax.random.normal(kx2, (B4, C4, T4), dtype=jnp.float32)
    ref4 = fms_reference(x4, w, b)
    out4 = jax.block_until_ready(fms(x4, w, b, fused_threshold_bytes=0))
    assert jnp.allclose(out4, ref4, atol=1e-5, rtol=1e-5), "mismatch (rem tile)"

    print("KERNEL_OK")
</pallas_src>

<mosaic_0001>
module attributes {stable_mosaic.version = 11 : i64} {
  func.func @_fused_kernel(%arg0: memref<2x16x256xf32, #tpu.memory_space<vmem>>, %arg1: memref<16x16xf32, #tpu.memory_space<vmem>>, %arg2: memref<1x16xf32, #tpu.memory_space<vmem>>, %arg3: memref<2x16x256xf32, #tpu.memory_space<vmem>>) attributes {dimension_semantics = [], scalar_prefetch = 0 : i64, scratch_operands = 0 : i64, tpu.core_type = #tpu.core_type<tc>} {
    %c0 = arith.constant 0 : index
    %c0_0 = arith.constant 0 : index
    %c0_1 = arith.constant 0 : index
    %0 = vector.load %arg0[%c0, %c0_0, %c0_1] : memref<2x16x256xf32, #tpu.memory_space<vmem>>, vector<2x16x256xf32>
    %cst = arith.constant dense<0.000000e+00> : vector<2x16xf32>
    %1 = vector.multi_reduction <add>, %0, %cst [2] : vector<2x16x256xf32> to vector<2x16xf32>
    %cst_2 = arith.constant 3.906250e-03 : f32
    %2 = vector.broadcast %cst_2 : f32 to vector<2x16xf32>
    %3 = arith.mulf %1, %2 : vector<2x16xf32>
    %c0_3 = arith.constant 0 : index
    %c0_4 = arith.constant 0 : index
    %4 = vector.load %arg1[%c0_3, %c0_4] : memref<16x16xf32, #tpu.memory_space<vmem>>, vector<16x16xf32>
    %cst_5 = arith.constant dense<0.000000e+00> : vector<2x16xf32>
    %5 = tpu.matmul %3, %4, %cst_5 {dimension_numbers = #tpu.dot_dimension_numbers<[1], [0], [0], [1], [0, 0, 1, 1], [], []>} : vector<2x16xf32>, vector<16x16xf32>, vector<2x16xf32> -> vector<2x16xf32>
    %c0_6 = arith.constant 0 : index
    %c0_7 = arith.constant 0 : index
    %6 = vector.load %arg2[%c0_6, %c0_7] : memref<1x16xf32, #tpu.memory_space<vmem>>, vector<1x16xf32>
    %7 = vector.broadcast %6 : vector<1x16xf32> to vector<2x16xf32>
    %8 = arith.addf %5, %7 : vector<2x16xf32>
    %cst_8 = arith.constant 0.000000e+00 : f32
    %9 = vector.broadcast %cst_8 : f32 to vector<2x16xf32>
    %10 = arith.subf %9, %8 : vector<2x16xf32>
    %11 = math.exp %10 : vector<2x16xf32>
    %cst_9 = arith.constant 1.000000e+00 : f32
    %12 = vector.broadcast %cst_9 : f32 to vector<2x16xf32>
    %13 = arith.addf %12, %11 : vector<2x16xf32>
    %cst_10 = arith.constant 1.000000e+00 : f32
    %14 = vector.broadcast %cst_10 : f32 to vector<2x16xf32>
    %15 = arith.divf %14, %13 : vector<2x16xf32>
    %16 = vector.shape_cast %15 : vector<2x16xf32> to vector<2x16x1xf32>
    %17 = vector.broadcast %16 : vector<2x16x1xf32> to vector<2x16x256xf32>
    %18 = arith.mulf %17, %0 : vector<2x16x256xf32>
    %19 = vector.broadcast %16 : vector<2x16x1xf32> to vector<2x16x256xf32>
    %20 = arith.addf %19, %18 : vector<2x16x256xf32>
    %c0_11 = arith.constant 0 : index
    %c0_12 = arith.constant 0 : index
    %c0_13 = arith.constant 0 : index
    %21 = vector.load %arg3[%c0_11, %c0_12, %c0_13] : memref<2x16x256xf32, #tpu.memory_space<vmem>>, vector<2x16x256xf32>
    tpu.vector_store %arg3[%c0_11, %c0_12, %c0_13], %20 {strides = array<i32>} : memref<2x16x256xf32, #tpu.memory_space<vmem>>, vector<2x16x256xf32>,
    return
  }
}

</mosaic_0001>

<llo_original>
// kernel: tpu_custom_call.1
$region0: #{tpu_custom_call.1}
  #allocation0 [shape = 'u32[]', space=smem, size = 0x4, offset = 0x4, fixed_abs, tag = 'smem constant byte address 0x4 - core index']
  #allocation1 [shape = 'u32[72,128]{1,0:T(1,128)}', space=vmem, size = 0x9000, scoped, tag = 'internal scratch']
  %s0 = inlined_call_operand.hbm [shape: f32[2,16,256], index: 0, kind: input, shape index: {}]
  %s1 = inlined_call_operand.hbm [shape: f32[16,16], index: 1, kind: input, shape index: {}]
  %s2 = inlined_call_operand.vmem [shape: f32[1,16], index: 2, kind: input, shape index: {}]
  %s3 = inlined_call_operand.hbm [shape: f32[2,16,256], index: 3, kind: output, shape index: {}]
  %s4 = sld [smem:[#allocation0]]
  $region30: #{tpu_custom_call.1} parent=0
    _
  %s6 = ssub.s32 1, %s4
  %s7 = scalar_select 0, %s6, %s4
  $region1: #{tpu_custom_call.1} parent=0
    #allocation2 [shape = 'u8[32768]{0}', space=vmem, size = 0x8000, scoped, tag = 'input window, operand 0, single buffered']
    #allocation3 [shape = 's32[1]{0}', space=sflag, size = 0x4, scoped, tag = 'scoped memory for tpu_custom_call.1']
    #allocation4 [shape = 's32[1]{0}', space=sflag, size = 0x4, scoped, tag = 'scoped memory for tpu_custom_call.1']
    #allocation5 [shape = 'u8[8192]{0}', space=vmem, size = 0x2000, scoped, tag = 'input window, operand 1, single buffered']
    #allocation6 [shape = 's32[1]{0}', space=sflag, size = 0x4, scoped, tag = 'scoped memory for tpu_custom_call.1']
    #allocation7 [shape = 'u8[32768]{0}', space=vmem, size = 0x8000, scoped, tag = 'output window, operand 0, single buffered']
    %8 = vsyncpa [#allocation3], 0
    %9 = vsyncpa [#allocation6], 0
    %10 = vsyncpa [#allocation4], 0
    // Predicated region
    $region2: #{tpu_custom_call.1} parent=1 // pred_check
      _
    $region3: #{tpu_custom_call.1} parent=1 // pred_check_branch
      %12 = sbr.rel (0) target = $region5
    $region4: #{tpu_custom_call.1} parent=1 // pred_region
      %14 = vsyncadd [#allocation3], 0
      %s15 = sshll.u32 %s0, 4
      %s16 = int_to_ptr.hbm [resolvable:$true] %s15
      %s17 = sshll.u32 [#allocation2], 4
      %s18 = int_to_ptr.vmem [resolvable:$true] %s17
      %23 = dma.hbm_to_vmem [thread:$0]  %s16, 1024, %s18, [#allocation3], 256, 256, 16
    $region5: #{tpu_custom_call.1} parent=1 // pred_fallthru
      _
    // Predicated region
    $region6: #{tpu_custom_call.1} parent=1 // pred_check
      _
    $region7: #{tpu_custom_call.1} parent=1 // pred_check_branch
      %25 = sbr.rel (0) target = $region9
    $region8: #{tpu_custom_call.1} parent=1 // pred_region
      %27 = vsyncadd [#allocation6], 0
      %s28 = sshll.u32 %s1, 4
      %s29 = int_to_ptr.hbm [resolvable:$true] %s28
      %s30 = sshll.u32 [#allocation5], 4
      %s31 = int_to_ptr.vmem [resolvable:$true] %s30
      %36 = dma.hbm_to_vmem [thread:$0]  %s29, 256, %s31, [#allocation6], 128, 128, 8
    $region9: #{tpu_custom_call.1} parent=1 // pred_fallthru
      _
    // Predicated region
    $region10: #{tpu_custom_call.1} parent=1 // pred_check
      _
    $region11: #{tpu_custom_call.1} parent=1 // pred_check_branch
      %38 = sbr.rel (0) target = $region13
    $region12: #{tpu_custom_call.1} parent=1 // pred_region
      _
    $region13: #{tpu_custom_call.1} parent=1 // pred_fallthru
      _
    // Predicated region
    $region14: #{tpu_custom_call.1} parent=1 // pred_check
      _
    $region15: #{tpu_custom_call.1} parent=1 // pred_check_branch
      %40 = sbr.rel (0) target = $region17
    $region16: #{tpu_custom_call.1} parent=1 // pred_region
      %42 = dma.done [#allocation3], 1024
    $region17: #{tpu_custom_call.1} parent=1 // pred_fallthru
      _
    // Predicated region
    $region18: #{tpu_custom_call.1} parent=1 // pred_check
      _
    $region19: #{tpu_custom_call.1} parent=1 // pred_check_branch
      %44 = sbr.rel (0) target = $region21
    $region20: #{tpu_custom_call.1} parent=1 // pred_region
      %46 = dma.done [#allocation6], 256
    $region21: #{tpu_custom_call.1} parent=1 // pred_fallthru
      _
    %v47 = vld [vmem:[#allocation2] sm:$0xff]
    %v48 = vld [vmem:[#allocation2 + $0x8] sm:$0xff]
    %v49 = vld [vmem:[#allocation2 + $0x10] sm:$0xff]
    %v50 = vld [vmem:[#allocation2 + $0x18] sm:$0xff]
    %v51 = vld [vmem:[#allocation2 + $0x20] sm:$0xff]
    %v52 = vld [vmem:[#allocation2 + $0x28] sm:$0xff]
    %v53 = vld [vmem:[#allocation2 + $0x30] sm:$0xff]
    %v54 = vld [vmem:[#allocation2 + $0x38] sm:$0xff]
    %v55 = vadd.f32 %v47, %v48
    %56 = vadd.xlane.f32.xlu0 %v55
    %v57 = vpop.xlane.xlu0 %56
    %v58 = vadd.f32 %v49, %v50
    %59 = vadd.xlane.f32.xlu0 %v58
    %v60 = vpop.xlane.xlu0 %59
    %v61 = vadd.f32 %v51, %v52
    %62 = vadd.xlane.f32.xlu0 %v61
    %v63 = vpop.xlane.xlu0 %62
    %v64 = vadd.f32 %v53, %v54
    %65 = vadd.xlane.f32.xlu0 %v64
    %v66 = vpop.xlane.xlu0 %65
    %v67 = vmul.f32 %v57, 0.00390625
    %v68 = vmul.f32 %v60, 0.00390625
    %v69 = vmul.f32 %v63, 0.00390625
    %v70 = vmul.f32 %v66, 0.00390625
    %v71 = vld [vmem:[#allocation5] sm:$0xff]
    %v72 = vld [vmem:[#allocation5 + $0x8] sm:$0xff]
    %v73 = vld [vmem:[%s2] sm:$0x1]
    %v75 = vperm.slane %v73, 0
    %v81 = vlaneseq
    %v82 = vand.u32 %v81, 127
    %v83 = vperm.slane %v67, %v82
    %v84 = vadd.s32 %v82, 4294967288
    %v85 = vperm.slane %v68, %v84
    %vm86 = vcmask 130112
    %v87 = vsel %vm86, %v85, %v83
    %v88 = vperm.slane %v69, %v82
    %v89 = vperm.slane %v70, %v84
    %v90 = vsel %vm86, %v89, %v88
    %vm91 = vcmask 1041409
    %v92 = vsel %vm91, %v90, %v87
    %vm93 = vcmask 130048
    %v94 = vsel %vm93, %v92, 0
    %96 = vmatpush.msra.mxu0 0.0
    %97 = vmatpush.msra.mxu0 0.0
    %98 = vmatpush.msra.mxu0 0.0
    %99 = vmatpush.msra.mxu0 0.0
    %100 = vmatpush.msra.mxu0 0.0
    %101 = vmatpush.msra.mxu0 0.0
    %102 = vmatpush.msra.mxu0 0.0
    %103 = vmatpush.msra.mxu0 0.0
    %104 = vmatpush.msra.mxu0 0.0
    %105 = vmatpush.msra.mxu0 0.0
    %106 = vmatpush.msra.mxu0 0.0
    %107 = vmatpush.msra.mxu0 0.0
    %108 = vmatpush.msra.mxu0 0.0
    %109 = vmatpush.msra.mxu0 0.0
    %110 = vmatpush.msra.mxu0 %v72
    %111 = vmatpush.msra.mxu0 %v71
    %112 = vmatmul.f32.gmra.mxu0 %v94
    %v113 = vpop.f32.mrf.mxu0
    %v114 = vadd.f32 %v75, %v113
    %115 = vdwg.mxu0
    %v116 = vsub.f32 0.0, %v114
    %v117 = vmul.f32 %v116, 1.442695
    %v118 = vpow.pop %v117
    %v119 = vadd.f32 %v118, 1.0
    %v120 = vrcp.pop %v119
    %v121 = vmul.f32 %v119, %v120
    %v122 = vsub.f32 1.0, %v121
    %v123 = vmul.f32 %v120, %v122
    %v124 = vadd.f32 %v120, %v123
    %vm125 = vweird.f32 %v119
    %vm126 = vweird.f32 %v120
    %vm127 = vmor %vm125, %vm126
    %v128 = vsel %vm127, %v120, %v124
    %v129 = vand.u32 2147483647, %v119
    %vm130 = vcmp.eq.f32.partialorder %v129, 8.507059e+37
    %v131 = vand.u32 %v119, 2147483648
    %v132 = vor.u32 1.1754944e-38, %v131
    %v133 = vsel %vm130, %v132, %v128
    %v134 = vmul.f32 1.0, %v133
    %v135 = vperm.slane %v134, 0
    %v136 = vlaneseq
    %v137 = vshrl.u32 %v136, 7
    %139 = vset.pattern.permute.xlu0 %v137
    %140 = vperm.xlu0 %139, %v135
    %v141 = vpop.permute.xlu0 %140
    %v142 = vlaneseq
    %v143 = vshrl.u32 %v142, 7
    %v144 = vadd.s32 %v143, 8
    %145 = vset.pattern.permute.xlu0 %v144
    %146 = vperm.xlu0 %145, %v135
    %v147 = vpop.permute.xlu0 %146
    %v148 = vperm.slane %v134, 1
    %v149 = vlaneseq
    %v150 = vshrl.u32 %v149, 7
    %152 = vset.pattern.permute.xlu0 %v150
    %153 = vperm.xlu0 %152, %v148
    %v154 = vpop.permute.xlu0 %153
    %v155 = vlaneseq
    %v156 = vshrl.u32 %v155, 7
    %v157 = vadd.s32 %v156, 8
    %158 = vset.pattern.permute.xlu0 %v157
    %159 = vperm.xlu0 %158, %v148
    %v160 = vpop.permute.xlu0 %159
    %v161 = vmul.f32 %v141, %v47
    %v162 = vmul.f32 %v141, %v48
    %v163 = vmul.f32 %v147, %v49
    %v164 = vmul.f32 %v147, %v50
    %v165 = vmul.f32 %v154, %v51
    %v166 = vmul.f32 %v154, %v52
    %v167 = vmul.f32 %v160, %v53
    %v168 = vmul.f32 %v160, %v54
    %v169 = vadd.f32 %v141, %v161
    %v170 = vadd.f32 %v141, %v162
    %v171 = vadd.f32 %v147, %v163
    %v172 = vadd.f32 %v147, %v164
    %v173 = vadd.f32 %v154, %v165
    %v174 = vadd.f32 %v154, %v166
    %v175 = vadd.f32 %v160, %v167
    %v176 = vadd.f32 %v160, %v168
    %177 = vst [vmem:[#allocation7] sm:$0xff] %v169
    %178 = vst [vmem:[#allocation7 + $0x8] sm:$0xff] %v170
    %179 = vst [vmem:[#allocation7 + $0x10] sm:$0xff] %v171
    %180 = vst [vmem:[#allocation7 + $0x18] sm:$0xff] %v172
    %181 = vst [vmem:[#allocation7 + $0x20] sm:$0xff] %v173
    %182 = vst [vmem:[#allocation7 + $0x28] sm:$0xff] %v174
    %183 = vst [vmem:[#allocation7 + $0x30] sm:$0xff] %v175
    %184 = vst [vmem:[#allocation7 + $0x38] sm:$0xff] %v176
    // Predicated region
    $region22: #{tpu_custom_call.1} parent=1 // pred_check
      _
    $region23: #{tpu_custom_call.1} parent=1 // pred_check_branch
      %186 = sbr.rel (0) target = $region25
    $region24: #{tpu_custom_call.1} parent=1 // pred_region
      %188 = vsyncadd [#allocation4], 0
      %s189 = sshll.u32 [#allocation7], 4
      %s190 = int_to_ptr.vmem [resolvable:$true] %s189
      %s191 = sshll.u32 %s3, 4
      %s192 = int_to_ptr.hbm [resolvable:$true] %s191
      %197 = dma.vmem_to_hbm [thread:$0]  %s190, 1024, %s192, [#allocation4], 256, 256, 16
    $region25: #{tpu_custom_call.1} parent=1 // pred_fallthru
      _
    // Predicated region
    $region26: #{tpu_custom_call.1} parent=1 // pred_check
      _
    $region27: #{tpu_custom_call.1} parent=1 // pred_check_branch
      %199 = sbr.rel (0) target = $region29
    $region28: #{tpu_custom_call.1} parent=1 // pred_region
      %201 = dma.done [#allocation4], 1024
    $region29: #{tpu_custom_call.1} parent=1 // pred_fallthru
      _
    %202 = vsyncpa [#allocation3], 1
    %203 = vsyncpa [#allocation6], 1
    %204 = vsyncpa [#allocation4], 1

</llo_original>
